<compile_context>
chip_gen: v7x
topology: tpu7x:2x2x1
jax: 0.10.0
libtpu: 0.0.40
codegen_flags: <defaults>
</compile_context>

<pallas_src>
import functools

import jax
import jax.numpy as jnp
from jax.experimental import pallas as pl
from jax.experimental.pallas import tpu as pltpu


# ---------------------------------------------------------------------------
# Parameter setup (deterministic, mirrors LegendreModulator.generate_basis_functions)
# ---------------------------------------------------------------------------
def generate_legendre_basis(window_len, scale=True, degree=1, zero_order=True,
                            dtype=jnp.float32):
    t = jnp.arange(window_len, dtype=dtype).reshape(-1, 1)
    if scale:
        t = t / (t.max() - t.min())
    cols = [jnp.ones((window_len, 1), dtype=dtype)]            # P_0
    if degree >= 1:
        cols.append(t * cols[0])                               # P_1
    for q in range(2, degree + 1):
        cols.append(((2 * q - 1) * t * cols[q - 1] - (q - 1) * cols[q - 2]) / q)
    y = jnp.concatenate(cols, axis=1)                          # (window_len, degree+1)
    if not zero_order:
        y = y[:, 1:]
    return y


# ---------------------------------------------------------------------------
# Pallas kernel: lane-dense outer product  o[k, n] = f[k, 0] * x[0, n]
# ---------------------------------------------------------------------------
def _legendre_outer_kernel(f_ref, x_ref, o_ref):
    # f_ref: (TM, 1)      -- resident across the whole grid (single DMA)
    # x_ref: (1, TILE_N)  -- streamed tile of the flattened B*S axis
    # o_ref: (TM, TILE_N) -- lane-dense output tile (unmasked stores)
    o_ref[...] = (f_ref[...] * x_ref[...]).astype(o_ref.dtype)


def _round_up(v, m):
    return ((v + m - 1) // m) * m


@functools.partial(jax.jit, static_argnames=("out_dtype",))
def legendre_modulator_forward(x, steps, functions, out_dtype=None):
    """x: (B, S, F) with F == 1; steps: (T,) int; functions: (window_len, M).

    Returns y of shape (B, S, T, M) == X[:, :, None, :] * functions[steps].
    """
    B, S, F = x.shape
    assert F == 1, (
        "LegendreModulator Pallas kernel expects trailing feature dim F == 1 "
        f"(got F={F}); the outer-product layout assumes the documented F==1 case.")
    # TODO(synk): support the F == M elementwise-broadcast case if ever needed.

    compute_dtype = functions.dtype               # mirrors PyTorch X.to(self.dtype)
    if out_dtype is None:
        out_dtype = compute_dtype
    out_dtype = jnp.dtype(out_dtype)

    x = x.astype(compute_dtype)
    f_sel = functions[steps].astype(compute_dtype)             # (T, M) gather glue
    T, M = f_sel.shape
    TM = T * M
    N = B * S                                                  # F == 1

    # ---- tiling of the flattened (lane) axis --------------------------------
    N128 = _round_up(N, 128)
    target_out_buf_bytes = 8 * 1024 * 1024                     # per buffer (x2 dbl-buf)
    max_tile = max(128, (target_out_buf_bytes // (TM * out_dtype.itemsize)) // 128 * 128)
    tile_n = int(min(N128, max_tile))
    grid_n = pl.cdiv(N128, tile_n)
    n_pad = grid_n * tile_n

    x_flat = x.reshape(1, N)
    if n_pad > N:
        x_flat = jnp.pad(x_flat, ((0, 0), (0, n_pad - N)))
    f_col = f_sel.reshape(TM, 1)

    out2d = pl.pallas_call(
        _legendre_outer_kernel,
        out_shape=jax.ShapeDtypeStruct((TM, n_pad), out_dtype),
        grid=(grid_n,),
        in_specs=[
            pl.BlockSpec((TM, 1), lambda i: (0, 0)),           # resident across grid
            pl.BlockSpec((1, tile_n), lambda i: (0, i)),       # streamed input tile
        ],
        out_specs=pl.BlockSpec((TM, tile_n), lambda i: (0, i)),
        compiler_params=pltpu.CompilerParams(
            dimension_semantics=("parallel",),                 # v7x: shard across 2 TCs
            vmem_limit_bytes=48 * 1024 * 1024,
        ),
        cost_estimate=pl.CostEstimate(
            flops=TM * n_pad,
            transcendentals=0,
            bytes_accessed=(TM + n_pad) * jnp.dtype(compute_dtype).itemsize
                           + TM * n_pad * out_dtype.itemsize,
        ),
    )(f_col, x_flat)

    # back to the PyTorch layout: (TM, N) -> (T, M, B, S) -> (B, S, T, M)
    y = out2d[:, :N].reshape(T, M, B, S).transpose(2, 3, 0, 1)
    return y


# ---------------------------------------------------------------------------
# Demo / correctness check
# ---------------------------------------------------------------------------
if __name__ == "__main__":
    # Module config
    window_len = 16
    degree = 3
    zero_order = True
    scale = True
    num_modulators = degree + int(zero_order)                  # 4

    functions = generate_legendre_basis(window_len, scale=scale, degree=degree,
                                        zero_order=zero_order)

    # Inputs: batch=2, seq=8, feat=1 (feat==1 so the PyTorch broadcast is valid)
    key = jax.random.PRNGKey(0)
    x = jax.random.normal(key, (2, 8, 1), dtype=jnp.float32)
    steps = jnp.arange(window_len, dtype=jnp.int32)            # modulate every window step

    y = legendre_modulator_forward(x, steps, functions)
    y = jax.block_until_ready(y)

    # Pure-JAX reference (exactly the PyTorch expression)
    y_ref = x[:, :, None, :] * functions[steps]
    assert y.shape == (2, 8, window_len, num_modulators), y.shape
    assert jnp.allclose(y, y_ref, atol=1e-6, rtol=1e-6), "mismatch vs reference"

    print("KERNEL_OK")
</pallas_src>

<mosaic_0001>
module attributes {stable_mosaic.version = 11 : i64} {
  func.func @_legendre_outer_kernel(%arg0: i32, %arg1: memref<64x1xf32, #tpu.memory_space<vmem>>, %arg2: memref<1x128xf32, #tpu.memory_space<vmem>>, %arg3: memref<64x128xf32, #tpu.memory_space<vmem>>) attributes {dimension_semantics = [#tpu.dimension_semantics<parallel>], iteration_bounds = array<i64: 1>, scalar_prefetch = 0 : i64, scratch_operands = 0 : i64, tpu.core_type = #tpu.core_type<tc>, window_params = [{pipeline_mode = #tpu.pipeline_mode<synchronous>, transform_indices = @transform_0, window_bounds = array<i64: 64, 1>}, {transform_indices = @transform_1, window_bounds = array<i64: 1, 128>}, {transform_indices = @transform_2, window_bounds = array<i64: 64, 128>}]} {
    %c0 = arith.constant 0 : index
    %c0_0 = arith.constant 0 : index
    %0 = vector.load %arg1[%c0, %c0_0] : memref<64x1xf32, #tpu.memory_space<vmem>>, vector<64x1xf32>
    %c0_1 = arith.constant 0 : index
    %c0_2 = arith.constant 0 : index
    %1 = vector.load %arg2[%c0_1, %c0_2] : memref<1x128xf32, #tpu.memory_space<vmem>>, vector<1x128xf32>
    %2 = vector.broadcast %0 : vector<64x1xf32> to vector<64x128xf32>
    %3 = vector.broadcast %1 : vector<1x128xf32> to vector<64x128xf32>
    %4 = arith.mulf %2, %3 : vector<64x128xf32>
    %c0_3 = arith.constant 0 : index
    %c0_4 = arith.constant 0 : index
    %5 = vector.load %arg3[%c0_3, %c0_4] : memref<64x128xf32, #tpu.memory_space<vmem>>, vector<64x128xf32>
    tpu.vector_store %arg3[%c0_3, %c0_4], %4 {strides = array<i32>} : memref<64x128xf32, #tpu.memory_space<vmem>>, vector<64x128xf32>,
    return
  }
  func.func @transform_0(%arg0: i32) -> (i32, i32) {
    %c0_i32 = arith.constant 0 : i32
    %c0_i32_0 = arith.constant 0 : i32
    %c0_i32_1 = arith.constant 0 : i32
    return %c0_i32, %c0_i32_0 : i32, i32
  }
  func.func @transform_1(%arg0: i32) -> (i32, i32) {
    %c0_i32 = arith.constant 0 : i32
    %c0_i32_0 = arith.constant 0 : i32
    return %c0_i32, %arg0 : i32, i32
  }
  func.func @transform_2(%arg0: i32) -> (i32, i32) {
    %c0_i32 = arith.constant 0 : i32
    %c0_i32_0 = arith.constant 0 : i32
    return %c0_i32, %arg0 : i32, i32
  }
}

</mosaic_0001>

<llo_original>
// kernel: legendre_modulator_forward.1
$region0: #{legendre_modulator_forward.1}
  #allocation0 [shape = 'u32[]', space=smem, size = 0x4, offset = 0x4, fixed_abs, tag = 'smem constant byte address 0x4 - core index']
  #allocation1 [shape = 'u32[144,128]{1,0:T(1,128)}', space=vmem, size = 0x12000, scoped, tag = 'internal scratch']
  %s0 = inlined_call_operand.vmem [shape: f32[64,1], index: 0, kind: input, shape index: {}]
  %s1 = inlined_call_operand.vmem [shape: f32[1,128], index: 1, kind: input, shape index: {}]
  %s2 = inlined_call_operand.vmem [shape: f32[64,128], index: 2, kind: output, shape index: {}]
  %s3 = sld [smem:[#allocation0]]
  $region18: #{legendre_modulator_forward.1} parent=0
    _
  %s5 = ssub.s32 1, %s3
  %s6 = scalar_select 0, %s5, %s3
  // Predicated region
  $region2: #{legendre_modulator_forward.1} parent=0 // pred_check
    _
  $region3: #{legendre_modulator_forward.1} parent=0 // pred_check_branch
    %8 = sbr.rel (0) target = $region5
  $region4: #{legendre_modulator_forward.1} parent=0 // pred_region
    _
  $region5: #{legendre_modulator_forward.1} parent=0 // pred_fallthru
    _
  // Predicated region
  $region6: #{legendre_modulator_forward.1} parent=0 // pred_check
    _
  $region7: #{legendre_modulator_forward.1} parent=0 // pred_check_branch
    %10 = sbr.rel (0) target = $region9
  $region8: #{legendre_modulator_forward.1} parent=0 // pred_region
    _
  $region9: #{legendre_modulator_forward.1} parent=0 // pred_fallthru
    _
  %v11 = vld [vmem:[%s0] sm:$0xff]
  %v12 = vld [vmem:[%s0 + $0x8] sm:$0xff]
  %v13 = vld [vmem:[%s0 + $0x10] sm:$0xff]
  %v14 = vld [vmem:[%s0 + $0x18] sm:$0xff]
  %v15 = vld [vmem:[%s0 + $0x20] sm:$0xff]
  %v16 = vld [vmem:[%s0 + $0x28] sm:$0xff]
  %v17 = vld [vmem:[%s0 + $0x30] sm:$0xff]
  %v18 = vld [vmem:[%s0 + $0x38] sm:$0xff]
  %v19 = vld [vmem:[%s1] sm:$0x1]
  %21 = vset.pattern.permute.xlu0 0
  %22 = vperm.xlu0 %21, %v11
  %v23 = vpop.permute.xlu0 %22
  %26 = vset.pattern.permute.xlu0 0
  %27 = vperm.xlu0 %26, %v12
  %v28 = vpop.permute.xlu0 %27
  %31 = vset.pattern.permute.xlu0 0
  %32 = vperm.xlu0 %31, %v13
  %v33 = vpop.permute.xlu0 %32
  %36 = vset.pattern.permute.xlu0 0
  %37 = vperm.xlu0 %36, %v14
  %v38 = vpop.permute.xlu0 %37
  %41 = vset.pattern.permute.xlu0 0
  %42 = vperm.xlu0 %41, %v15
  %v43 = vpop.permute.xlu0 %42
  %46 = vset.pattern.permute.xlu0 0
  %47 = vperm.xlu0 %46, %v16
  %v48 = vpop.permute.xlu0 %47
  %51 = vset.pattern.permute.xlu0 0
  %52 = vperm.xlu0 %51, %v17
  %v53 = vpop.permute.xlu0 %52
  %56 = vset.pattern.permute.xlu0 0
  %57 = vperm.xlu0 %56, %v18
  %v58 = vpop.permute.xlu0 %57
  %v61 = vlaneseq
  %v62 = vshrl.u32 %v61, 7
  %v63 = vsub.s32 0, %v62
  %v64 = vrot.slane %v19, %v63
  %v66 = vmul.f32 %v23, %v64
  %v67 = vmul.f32 %v28, %v64
  %v68 = vmul.f32 %v33, %v64
  %v69 = vmul.f32 %v38, %v64
  %v70 = vmul.f32 %v43, %v64
  %v71 = vmul.f32 %v48, %v64
  %v72 = vmul.f32 %v53, %v64
  %v73 = vmul.f32 %v58, %v64
  %74 = vst [vmem:[%s2] sm:$0xff] %v66
  %75 = vst [vmem:[%s2 + $0x8] sm:$0xff] %v67
  %76 = vst [vmem:[%s2 + $0x10] sm:$0xff] %v68
  %77 = vst [vmem:[%s2 + $0x18] sm:$0xff] %v69
  %78 = vst [vmem:[%s2 + $0x20] sm:$0xff] %v70
  %79 = vst [vmem:[%s2 + $0x28] sm:$0xff] %v71
  %80 = vst [vmem:[%s2 + $0x30] sm:$0xff] %v72
  %81 = vst [vmem:[%s2 + $0x38] sm:$0xff] %v73
  // Predicated region
  $region10: #{legendre_modulator_forward.1} parent=0 // pred_check
    _
  $region11: #{legendre_modulator_forward.1} parent=0 // pred_check_branch
    %83 = sbr.rel (0) target = $region13
  $region12: #{legendre_modulator_forward.1} parent=0 // pred_region
    _
  $region13: #{legendre_modulator_forward.1} parent=0 // pred_fallthru
    _
  // Predicated region
  $region14: #{legendre_modulator_forward.1} parent=0 // pred_check
    _
  $region15: #{legendre_modulator_forward.1} parent=0 // pred_check_branch
    %85 = sbr.rel (0) target = $region17
  $region16: #{legendre_modulator_forward.1} parent=0 // pred_region
    _
  $region17: #{legendre_modulator_forward.1} parent=0 // pred_fallthru
    _

</llo_original>
